<compile_context>
chip_gen: v6e
topology: v6e:2x2x1
jax: 0.10.0
libtpu: 0.0.40
codegen_flags: <defaults>
</compile_context>

<pallas_src>
import jax
import jax.numpy as jnp
from jax.experimental import pallas as pl
from jax.experimental.pallas import tpu as pltpu


def _copy_kernel(x_ref, o_ref):
    # Lane-dense 2D copy: plain unmasked vld/vst on interior blocks; Pallas
    # masks partial edge blocks automatically.
    o_ref[...] = x_ref[...]


# Sublane pack per dtype itemsize (f32 -> 8, bf16 -> 16, int8/fp8 -> 32).
_SUBLANE = {4: 8, 2: 16, 1: 32}


def _largest_divisor_multiple(n: int, unit: int, max_val: int) -> int:
    """Largest multiple of `unit` that divides `n` and is <= max_val (0 if none)."""
    best = 0
    k = 1
    limit = min(n, max_val)
    while unit * k <= limit:
        if n % (unit * k) == 0:
            best = unit * k
        k += 1
    return best


def _pallas_copy_2d(arr, block_shape, *, vmem_limit_bytes, donate_input):
    """HBM-bandwidth-bound tiled copy of a 2D array with cdiv grid + masked edges."""
    r, c = arr.shape
    br, bc = block_shape
    itemsize = jnp.dtype(arr.dtype).itemsize
    grid = (pl.cdiv(r, br), pl.cdiv(c, bc))
    return pl.pallas_call(
        _copy_kernel,
        out_shape=jax.ShapeDtypeStruct((r, c), arr.dtype),
        grid=grid,
        in_specs=[pl.BlockSpec((br, bc), lambda i, j: (i, j))],
        out_specs=pl.BlockSpec((br, bc), lambda i, j: (i, j)),
        compiler_params=pltpu.CompilerParams(
            # Pure copy: every tile independent — lets v7x split the grid
            # across its two TensorCores; harmless on v5e/v6e.
            dimension_semantics=("parallel", "parallel"),
            vmem_limit_bytes=vmem_limit_bytes),
        # Advisory: zero flops, purely memory-bound (read + write).
        cost_estimate=pl.CostEstimate(
            flops=0, transcendentals=0, bytes_accessed=2 * r * c * itemsize),
        input_output_aliases=({0: 0} if donate_input else {}),
    )(arr)


def view_flatten(x, *, force_kernel=False, donate_input=False,
                 target_block_bytes=4 << 20, vmem_limit_bytes=32 << 20):
    """Pallas equivalent of torch `x.view(x.size(0), -1)` (contiguous input).

    Default: metadata-only reshape (zero HBM traffic) — the optimal "kernel"
    for a standalone view is no kernel.  `force_kernel=True` materializes the
    result with a tiled, pipelined HBM copy (useful at a fusion boundary or
    when a non-aliased buffer is required).
    """
    b = x.shape[0]
    flat = 1
    for d in x.shape[1:]:
        flat *= d

    # Metadata-only flatten; element ordering identical to Tensor.view(N, -1).
    x2d = x.reshape(b, flat)

    # Fast path: skip pallas_call entirely.
    if not force_kernel or b == 0 or flat == 0:
        return x2d

    itemsize = jnp.dtype(x.dtype).itemsize
    sub = _SUBLANE.get(itemsize, 8)
    n_total = b * flat

    if n_total % 128 == 0:
        # Re-view the contiguous buffer as a lane-dense slab (rows, lane) so
        # block sizing is independent of how awkward (b, flat) is and each
        # per-step DMA is a single contiguous descriptor.
        max_lane = max(128, target_block_bytes // (itemsize * sub))
        lane = _largest_divisor_multiple(n_total, 128, max_lane)
        rows = n_total // lane
        block_rows = max(sub,
                         (target_block_bytes // (itemsize * lane)) // sub * sub)
        if block_rows >= rows:
            block_rows = rows  # full-extent block: always a legal block dim
        slab = x2d.reshape(rows, lane)
        out = _pallas_copy_2d(slab, (block_rows, lane),
                              vmem_limit_bytes=vmem_limit_bytes,
                              donate_input=donate_input)
        return out.reshape(b, flat)

    # Total size not a multiple of 128: tile the logical (b, flat) view with
    # (sublane, 128)-multiple blocks and cdiv grids; Pallas masks the partial
    # edge blocks (no full-dimension fallback -> no VMEM blow-up).
    if flat >= 128:
        block_f = min((flat // 128) * 128,
                      max(128,
                          (target_block_bytes // (itemsize * sub) // 128) * 128))
    else:
        block_f = flat  # full dim: always legal
    block_b = max(sub, (target_block_bytes // (itemsize * block_f)) // sub * sub)
    if block_b >= b:
        block_b = b
    return _pallas_copy_2d(x2d, (block_b, block_f),
                           vmem_limit_bytes=vmem_limit_bytes,
                           donate_input=donate_input)


if __name__ == "__main__":
    key = jax.random.PRNGKey(0)

    # Small NCHW input consistent with a conv feature map feeding a head.
    x = jax.random.normal(key, (2, 4, 16, 16), dtype=jnp.float32)
    ref = x.reshape(x.shape[0], -1)

    # 1) Default fast path: metadata-only reshape (optimal for standalone view).
    y_fast = jax.block_until_ready(view_flatten(x))
    assert y_fast.shape == (2, 4 * 16 * 16)
    assert y_fast.dtype == x.dtype
    assert jnp.array_equal(y_fast, ref)

    # 2) Forced kernel path: single-block lane-dense slab copy.
    y_k = jax.block_until_ready(view_flatten(x, force_kernel=True))
    assert jnp.array_equal(y_k, ref)

    # 3) Multi-step slab grid (small target block to exercise the pipeline).
    x2 = jax.random.normal(jax.random.PRNGKey(0), (64, 4, 32, 32),
                           dtype=jnp.float32)
    y2 = jax.block_until_ready(
        view_flatten(x2, force_kernel=True, target_block_bytes=64 * 1024))
    assert jnp.array_equal(y2, x2.reshape(64, -1))

    # 4) Non-128-divisible total: cdiv fallback with a masked edge block.
    x3 = jax.random.normal(jax.random.PRNGKey(0), (10, 3, 10, 10),
                           dtype=jnp.float32)
    y3 = jax.block_until_ready(
        view_flatten(x3, force_kernel=True, target_block_bytes=64 * 1024))
    assert jnp.array_equal(y3, x3.reshape(10, -1))

    print("KERNEL_OK")
</pallas_src>

<mosaic_0001>
module attributes {stable_mosaic.version = 11 : i64} {
  func.func @_copy_kernel(%arg0: i32, %arg1: i32, %arg2: memref<1x2048xf32, #tpu.memory_space<vmem>>, %arg3: memref<1x2048xf32, #tpu.memory_space<vmem>>) attributes {dimension_semantics = [#tpu.dimension_semantics<parallel>, #tpu.dimension_semantics<parallel>], iteration_bounds = array<i64: 1, 1>, scalar_prefetch = 0 : i64, scratch_operands = 0 : i64, tpu.core_type = #tpu.core_type<tc>, window_params = [{transform_indices = @transform_0, window_bounds = array<i64: 1, 2048>}, {transform_indices = @transform_1, window_bounds = array<i64: 1, 2048>}]} {
    %c0 = arith.constant 0 : index
    %c0_0 = arith.constant 0 : index
    %0 = vector.load %arg2[%c0, %c0_0] : memref<1x2048xf32, #tpu.memory_space<vmem>>, vector<1x2048xf32>
    %c0_1 = arith.constant 0 : index
    %c0_2 = arith.constant 0 : index
    %1 = vector.load %arg3[%c0_1, %c0_2] : memref<1x2048xf32, #tpu.memory_space<vmem>>, vector<1x2048xf32>
    tpu.vector_store %arg3[%c0_1, %c0_2], %0 {strides = array<i32>} : memref<1x2048xf32, #tpu.memory_space<vmem>>, vector<1x2048xf32>,
    return
  }
  func.func @transform_0(%arg0: i32, %arg1: i32) -> (i32, i32) {
    %c0_i32 = arith.constant 0 : i32
    return %arg0, %arg1 : i32, i32
  }
  func.func @transform_1(%arg0: i32, %arg1: i32) -> (i32, i32) {
    %c0_i32 = arith.constant 0 : i32
    return %arg0, %arg1 : i32, i32
  }
}

</mosaic_0001>

<llo_original>
// kernel: tpu_custom_call.1
$region0: #{tpu_custom_call.1}
  #allocation0 [shape = 'u32[]', space=smem, size = 0x4, offset = 0x4, fixed_abs, tag = 'smem constant byte address 0x4 - core index']
  #allocation1 [shape = 'u32[144,128]{1,0:T(1,128)}', space=vmem, size = 0x12000, scoped, tag = 'internal scratch']
  %s0 = inlined_call_operand.hbm [shape: f32[1,2048], index: 0, kind: input, shape index: {}]
  %s1 = inlined_call_operand.hbm [shape: f32[1,2048], index: 1, kind: output, shape index: {}]
  %s2 = sld [smem:[#allocation0]]
  $region18: #{tpu_custom_call.1} parent=0
    _
  %s4 = ssub.s32 1, %s2
  %s5 = scalar_select 0, %s4, %s2
  $region1: #{tpu_custom_call.1} parent=0
    #allocation2 [shape = 'u8[8192]{0}', space=vmem, size = 0x2000, scoped, tag = 'input window, operand 0, single buffered']
    #allocation3 [shape = 's32[1]{0}', space=sflag, size = 0x4, scoped, tag = 'scoped memory for tpu_custom_call.1']
    #allocation4 [shape = 's32[1]{0}', space=sflag, size = 0x4, scoped, tag = 'scoped memory for tpu_custom_call.1']
    #allocation5 [shape = 'u8[8192]{0}', space=vmem, size = 0x2000, scoped, tag = 'output window, operand 0, single buffered']
    %6 = vsyncpa [#allocation3], 0
    %7 = vsyncpa [#allocation4], 0
    // Predicated region
    $region2: #{tpu_custom_call.1} parent=1 // pred_check
      _
    $region3: #{tpu_custom_call.1} parent=1 // pred_check_branch
      %9 = sbr.rel (0) target = $region5
    $region4: #{tpu_custom_call.1} parent=1 // pred_region
      %s11 = ssub.s32 256, 256
      %12 = vsyncadd [#allocation3], %s11
      %s14 = sshll.u32 [#allocation2], 4
      %s15 = int_to_ptr.vmem [resolvable:$true] %s14
      %17 = dma.hbm_to_vmem [thread:$0]  %s0, 256, %s15, [#allocation3]
    $region5: #{tpu_custom_call.1} parent=1 // pred_fallthru
      _
    // Predicated region
    $region6: #{tpu_custom_call.1} parent=1 // pred_check
      _
    $region7: #{tpu_custom_call.1} parent=1 // pred_check_branch
      %19 = sbr.rel (0) target = $region9
    $region8: #{tpu_custom_call.1} parent=1 // pred_region
      %20 = dma.done [#allocation3], 256
    $region9: #{tpu_custom_call.1} parent=1 // pred_fallthru
      _
    %v21 = vld [vmem:[#allocation2] sm:$0xff]
    %v22 = vld [vmem:[#allocation2 + $0x8] sm:$0xff]
    %23 = vst [vmem:[#allocation5] sm:$0xff] %v21
    %24 = vst [vmem:[#allocation5 + $0x8] sm:$0xff] %v22
    // Predicated region
    $region10: #{tpu_custom_call.1} parent=1 // pred_check
      _
    $region11: #{tpu_custom_call.1} parent=1 // pred_check_branch
      %26 = sbr.rel (0) target = $region13
    $region12: #{tpu_custom_call.1} parent=1 // pred_region
      %s28 = ssub.s32 256, 256
      %29 = vsyncadd [#allocation4], %s28
      %s31 = sshll.u32 [#allocation5], 4
      %s32 = int_to_ptr.vmem [resolvable:$true] %s31
      %34 = dma.vmem_to_hbm [thread:$0]  %s32, 256, %s1, [#allocation4]
    $region13: #{tpu_custom_call.1} parent=1 // pred_fallthru
      _
    // Predicated region
    $region14: #{tpu_custom_call.1} parent=1 // pred_check
      _
    $region15: #{tpu_custom_call.1} parent=1 // pred_check_branch
      %36 = sbr.rel (0) target = $region17
    $region16: #{tpu_custom_call.1} parent=1 // pred_region
      %37 = dma.done [#allocation4], 256
    $region17: #{tpu_custom_call.1} parent=1 // pred_fallthru
      _
    %38 = vsyncpa [#allocation3], 1
    %39 = vsyncpa [#allocation4], 1

</llo_original>
